<compile_context>
chip_gen: v7x
topology: tpu7x:2x2x1
jax: 0.10.0
libtpu: 0.0.40
codegen_flags: <defaults>
</compile_context>

<pallas_src>
import jax
import jax.numpy as jnp
from jax.experimental import pallas as pl
from jax.experimental.pallas import tpu as pltpu

EPS = 1e-5


# ----------------------------------------------------------------------------
# Kernel: one TILE_B-row slab of the batch per grid step.
# ----------------------------------------------------------------------------
def mlp_kernel(x_ref,
               w1_ref, b1_ref,
               w2_ref, b2_ref,
               w3_ref, b3_ref,
               w4_ref, b4_ref,
               o_ref):
    # Cast the f32 input tile to bf16 in-kernel (hides under the matmul);
    # no wrapper-side cast pass over x in HBM.
    x = x_ref[...].astype(jnp.bfloat16)

    # block 1: Linear(in,256) [BN folded] + ReLU   (Dropout = identity, eval)
    h = jnp.dot(x, w1_ref[...],
                preferred_element_type=jnp.float32) + b1_ref[...]
    h = jnp.maximum(h, 0.0)

    # block 2: Linear(256,128) [BN folded] + ReLU
    h = jnp.dot(h.astype(jnp.bfloat16), w2_ref[...],
                preferred_element_type=jnp.float32) + b2_ref[...]
    h = jnp.maximum(h, 0.0)

    # block 3: Linear(128,64) [BN folded] + ReLU
    h = jnp.dot(h.astype(jnp.bfloat16), w3_ref[...],
                preferred_element_type=jnp.float32) + b3_ref[...]
    h = jnp.maximum(h, 0.0)

    # head: Linear(64,1) as VPU multiply + XLU row-reduce (an N=1 MXU pass
    # would waste a full MXU drain), then a numerically-stable sigmoid:
    #   z >= 0: 1/(1+e^-z),  z < 0: 1 - 1/(1+e^z)   with e = exp(-|z|) <= 1,
    # exp on EUP, approx reciprocal (separate EUP slot), clamped to [0,1].
    z = jnp.sum(h * w4_ref[...], axis=-1, keepdims=True) + b4_ref[...]
    e = jnp.exp(-jnp.abs(z))
    r = pl.reciprocal(1.0 + e, approx=True)
    sig = jnp.where(z >= 0.0, r, 1.0 - r)
    o_ref[...] = jnp.clip(sig, 0.0, 1.0)
    # TODO(synk): if profiling at very large B shows the skinny (TILE_B, 1)
    # writeback exposed, switch to a lane-dense (1, TILE_B) output slab.


# ----------------------------------------------------------------------------
# Parameter setup / BN folding
# ----------------------------------------------------------------------------
def init_params(key, input_dim):
    """PyTorch-shaped params; Linear weights stored (in, out) for x @ W."""
    dims = [input_dim, 256, 128, 64, 1]
    keys = jax.random.split(key, 16)
    ki = iter(range(16))
    params = []
    for layer in range(4):
        d_in, d_out = dims[layer], dims[layer + 1]
        bound = 1.0 / jnp.sqrt(d_in)
        w = jax.random.uniform(keys[next(ki)], (d_in, d_out), jnp.float32, -bound, bound)
        b = jax.random.uniform(keys[next(ki)], (1, d_out), jnp.float32, -bound, bound)
        params += [w, b]
        if layer < 3:  # BatchNorm1d follows the first three Linears only
            gamma = 1.0 + 0.1 * jax.random.normal(keys[next(ki)], (1, d_out), jnp.float32)
            beta = 0.1 * jax.random.normal(keys[next(ki)], (1, d_out), jnp.float32)
            r_mean = 0.05 * jnp.arange(d_out, dtype=jnp.float32).reshape(1, d_out) / d_out
            r_var = 1.0 + 0.01 * jnp.arange(d_out, dtype=jnp.float32).reshape(1, d_out) / d_out
            params += [gamma, beta, r_mean, r_var]
    return tuple(params)


def fold_params(params):
    """Fold eval-mode BN into the Linear; cast matmul weights to bf16."""
    (w1, b1, g1, be1, m1, v1,
     w2, b2, g2, be2, m2, v2,
     w3, b3, g3, be3, m3, v3,
     w4, b4) = params

    def fold(w, b, g, be, m, v):
        s = g * jax.lax.rsqrt(v + EPS)                    # (1, out)
        w_f = (w * s).astype(jnp.bfloat16)                # scale columns
        b_f = ((b - m) * s + be).astype(jnp.float32)
        return w_f, b_f

    w1f, b1f = fold(w1, b1, g1, be1, m1, v1)
    w2f, b2f = fold(w2, b2, g2, be2, m2, v2)
    w3f, b3f = fold(w3, b3, g3, be3, m3, v3)
    w4_row = jnp.transpose(w4).astype(jnp.float32)        # (1, 64) for VPU head
    b4f = b4.astype(jnp.float32)                          # (1, 1)
    return (w1f, b1f, w2f, b2f, w3f, b3f, w4_row, b4f)


# ----------------------------------------------------------------------------
# Tile selection
# ----------------------------------------------------------------------------
def _round_up(n, m):
    return ((n + m - 1) // m) * m


def _choose_tile_b(batch):
    """Batch tile:
      * big enough to amortize the ~0.35 us per-grid-step pipeline overhead
        (cap 2048 rows; working set stays far under VMEM even on v7x),
      * >= 2 grid steps (target up to 8) whenever batch > 256 so v7x's two
        TensorCores both get work via dimension_semantics=("parallel",),
      * balanced (tile ~= cdiv(B, steps)) so pad waste stays under one tile.
    """
    CAP = 2048
    MIN_STEP_ROWS = 256
    if batch <= MIN_STEP_ROWS:
        return _round_up(max(batch, 8), 8)              # single step, minimal pad
    steps = max(2, pl.cdiv(batch, CAP))                  # keep tile <= CAP
    steps = max(steps, min(8, pl.cdiv(batch, MIN_STEP_ROWS)))
    return min(CAP, _round_up(pl.cdiv(batch, steps), 32))


# ----------------------------------------------------------------------------
# Forward wrapper
# ----------------------------------------------------------------------------
@jax.jit
def advanced_nn_forward(x, folded):
    w1, b1, w2, b2, w3, b3, w4, b4 = folded
    B, D_in = x.shape

    TILE_B = _choose_tile_b(B)
    B_pad = _round_up(B, TILE_B)
    if B_pad != B:
        x = jnp.pad(x, ((0, B_pad - B), (0, 0)))   # f32; only when needed

    params_in = (w1, b1, w2, b2, w3, b3, w4, b4)
    const = lambda i: (0, 0)                       # weights stay resident

    def resident(p):
        # constant index_map -> a single buffer is enough (no double-buffer)
        return pl.BlockSpec(p.shape, const, pipeline_mode=pl.Buffered(1))

    weight_bytes = sum(int(p.size) * p.dtype.itemsize for p in params_in)

    # Per-step VMEM working set (double-buffered x/out tiles, resident
    # weights, f32 intermediates); clamp to [32 MiB, 64 MiB] so the limit is
    # valid on v5e/v6e (128 MiB phys) and v7x (64 MiB phys).
    vmem_need = (2 * TILE_B * D_in * 4
                 + 2 * TILE_B * 4
                 + 2 * weight_bytes
                 + TILE_B * (256 + 128 + 64) * 4)
    vmem_limit = int(min(64 * 1024 * 1024, max(32 * 1024 * 1024, 2 * vmem_need)))

    flops = 2 * B_pad * (D_in * 256 + 256 * 128 + 128 * 64 + 64)
    bytes_accessed = (B_pad * D_in * 4            # x (f32, DMA'd once)
                      + weight_bytes
                      + B_pad * 4)                # output

    out = pl.pallas_call(
        mlp_kernel,
        out_shape=jax.ShapeDtypeStruct((B_pad, 1), jnp.float32),
        grid_spec=pltpu.PrefetchScalarGridSpec(
            num_scalar_prefetch=0,
            grid=(B_pad // TILE_B,),
            in_specs=[
                pl.BlockSpec((TILE_B, D_in), lambda i: (i, 0)),
                resident(w1), resident(b1),
                resident(w2), resident(b2),
                resident(w3), resident(b3),
                resident(w4), resident(b4),
            ],
            out_specs=pl.BlockSpec((TILE_B, 1), lambda i: (i, 0)),
        ),
        compiler_params=pltpu.CompilerParams(
            dimension_semantics=("parallel",),       # megacore on v7x
            vmem_limit_bytes=vmem_limit,
        ),
        cost_estimate=pl.CostEstimate(
            flops=flops,
            transcendentals=2 * B_pad,
            bytes_accessed=bytes_accessed,
        ),
    )(x, *params_in)
    return out[:B]


# ----------------------------------------------------------------------------
# Pure-JAX f32 reference (unfolded BN, exact sigmoid) for correctness check.
# ----------------------------------------------------------------------------
def reference_forward(x, params):
    (w1, b1, g1, be1, m1, v1,
     w2, b2, g2, be2, m2, v2,
     w3, b3, g3, be3, m3, v3,
     w4, b4) = params

    def bn(h, g, be, m, v):
        return (h - m) * jax.lax.rsqrt(v + EPS) * g + be

    h = jnp.maximum(bn(x @ w1 + b1, g1, be1, m1, v1), 0.0)
    h = jnp.maximum(bn(h @ w2 + b2, g2, be2, m2, v2), 0.0)
    h = jnp.maximum(bn(h @ w3 + b3, g3, be3, m3, v3), 0.0)
    return jax.nn.sigmoid(h @ w4 + b4)


if __name__ == "__main__":
    key = jax.random.PRNGKey(0)
    k_x, k_p = jax.random.split(key)

    batch, input_dim = 8, 32
    x = jax.random.normal(k_x, (batch, input_dim), jnp.float32)
    params = init_params(k_p, input_dim)
    folded = fold_params(params)

    out = advanced_nn_forward(x, folded)
    out = jax.block_until_ready(out)

    ref = reference_forward(x, params)
    assert out.shape == (batch, 1), out.shape
    # bf16 matmul operands + approx-reciprocal sigmoid vs full-f32 reference:
    # outputs live in [0,1]; 2e-2 absolute tolerance is comfortably met.
    assert jnp.allclose(out, ref, atol=2e-2), (out, ref)
    assert bool(jnp.all(out >= 0.0)) and bool(jnp.all(out <= 1.0))

    print("KERNEL_OK")
</pallas_src>

<mosaic_0001>
module attributes {stable_mosaic.version = 11 : i64} {
  func.func @mlp_kernel(%arg0: i32, %arg1: memref<8x32xf32, #tpu.memory_space<vmem>>, %arg2: memref<32x256xbf16, #tpu.memory_space<vmem>>, %arg3: memref<1x256xf32, #tpu.memory_space<vmem>>, %arg4: memref<256x128xbf16, #tpu.memory_space<vmem>>, %arg5: memref<1x128xf32, #tpu.memory_space<vmem>>, %arg6: memref<128x64xbf16, #tpu.memory_space<vmem>>, %arg7: memref<1x64xf32, #tpu.memory_space<vmem>>, %arg8: memref<1x64xf32, #tpu.memory_space<vmem>>, %arg9: memref<1x1xf32, #tpu.memory_space<vmem>>, %arg10: memref<8x1xf32, #tpu.memory_space<vmem>>) attributes {dimension_semantics = [#tpu.dimension_semantics<parallel>], iteration_bounds = array<i64: 1>, scalar_prefetch = 0 : i64, scratch_operands = 0 : i64, tpu.core_type = #tpu.core_type<tc>, window_params = [{transform_indices = @transform_0, window_bounds = array<i64: 8, 32>}, {pipeline_mode = #tpu.pipeline_mode<synchronous>, transform_indices = @transform_1, window_bounds = array<i64: 32, 256>}, {pipeline_mode = #tpu.pipeline_mode<synchronous>, transform_indices = @transform_2, window_bounds = array<i64: 1, 256>}, {pipeline_mode = #tpu.pipeline_mode<synchronous>, transform_indices = @transform_3, window_bounds = array<i64: 256, 128>}, {pipeline_mode = #tpu.pipeline_mode<synchronous>, transform_indices = @transform_4, window_bounds = array<i64: 1, 128>}, {pipeline_mode = #tpu.pipeline_mode<synchronous>, transform_indices = @transform_5, window_bounds = array<i64: 128, 64>}, {pipeline_mode = #tpu.pipeline_mode<synchronous>, transform_indices = @transform_6, window_bounds = array<i64: 1, 64>}, {pipeline_mode = #tpu.pipeline_mode<synchronous>, transform_indices = @transform_7, window_bounds = array<i64: 1, 64>}, {pipeline_mode = #tpu.pipeline_mode<synchronous>, transform_indices = @transform_8, window_bounds = array<i64: 1, 1>}, {transform_indices = @transform_9, window_bounds = array<i64: 8, 1>}]} {
    %c0 = arith.constant 0 : index
    %c0_0 = arith.constant 0 : index
    %0 = vector.load %arg1[%c0, %c0_0] : memref<8x32xf32, #tpu.memory_space<vmem>>, vector<8x32xf32>
    %1 = arith.truncf %0 : vector<8x32xf32> to vector<8x32xbf16>
    %c0_1 = arith.constant 0 : index
    %c0_2 = arith.constant 0 : index
    %2 = vector.load %arg2[%c0_1, %c0_2] : memref<32x256xbf16, #tpu.memory_space<vmem>>, vector<32x256xbf16>
    %cst = arith.constant dense<0.000000e+00> : vector<8x256xf32>
    %3 = tpu.matmul %1, %2, %cst {dimension_numbers = #tpu.dot_dimension_numbers<[1], [0], [0], [1], [0, 0, 1, 1], [], []>} : vector<8x32xbf16>, vector<32x256xbf16>, vector<8x256xf32> -> vector<8x256xf32>
    %c0_3 = arith.constant 0 : index
    %c0_4 = arith.constant 0 : index
    %4 = vector.load %arg3[%c0_3, %c0_4] : memref<1x256xf32, #tpu.memory_space<vmem>>, vector<1x256xf32>
    %5 = vector.broadcast %4 : vector<1x256xf32> to vector<8x256xf32>
    %6 = arith.addf %3, %5 : vector<8x256xf32>
    %cst_5 = arith.constant 0.000000e+00 : f32
    %7 = vector.broadcast %cst_5 : f32 to vector<8x256xf32>
    %8 = arith.maximumf %6, %7 : vector<8x256xf32>
    %9 = arith.truncf %8 : vector<8x256xf32> to vector<8x256xbf16>
    %c0_6 = arith.constant 0 : index
    %c0_7 = arith.constant 0 : index
    %10 = vector.load %arg4[%c0_6, %c0_7] : memref<256x128xbf16, #tpu.memory_space<vmem>>, vector<256x128xbf16>
    %cst_8 = arith.constant dense<0.000000e+00> : vector<8x128xf32>
    %11 = tpu.matmul %9, %10, %cst_8 {dimension_numbers = #tpu.dot_dimension_numbers<[1], [0], [0], [1], [0, 0, 1, 1], [], []>} : vector<8x256xbf16>, vector<256x128xbf16>, vector<8x128xf32> -> vector<8x128xf32>
    %c0_9 = arith.constant 0 : index
    %c0_10 = arith.constant 0 : index
    %12 = vector.load %arg5[%c0_9, %c0_10] : memref<1x128xf32, #tpu.memory_space<vmem>>, vector<1x128xf32>
    %13 = vector.broadcast %12 : vector<1x128xf32> to vector<8x128xf32>
    %14 = arith.addf %11, %13 : vector<8x128xf32>
    %cst_11 = arith.constant 0.000000e+00 : f32
    %15 = vector.broadcast %cst_11 : f32 to vector<8x128xf32>
    %16 = arith.maximumf %14, %15 : vector<8x128xf32>
    %17 = arith.truncf %16 : vector<8x128xf32> to vector<8x128xbf16>
    %c0_12 = arith.constant 0 : index
    %c0_13 = arith.constant 0 : index
    %18 = vector.load %arg6[%c0_12, %c0_13] : memref<128x64xbf16, #tpu.memory_space<vmem>>, vector<128x64xbf16>
    %cst_14 = arith.constant dense<0.000000e+00> : vector<8x64xf32>
    %19 = tpu.matmul %17, %18, %cst_14 {dimension_numbers = #tpu.dot_dimension_numbers<[1], [0], [0], [1], [0, 0, 1, 1], [], []>} : vector<8x128xbf16>, vector<128x64xbf16>, vector<8x64xf32> -> vector<8x64xf32>
    %c0_15 = arith.constant 0 : index
    %c0_16 = arith.constant 0 : index
    %20 = vector.load %arg7[%c0_15, %c0_16] : memref<1x64xf32, #tpu.memory_space<vmem>>, vector<1x64xf32>
    %21 = vector.broadcast %20 : vector<1x64xf32> to vector<8x64xf32>
    %22 = arith.addf %19, %21 : vector<8x64xf32>
    %cst_17 = arith.constant 0.000000e+00 : f32
    %23 = vector.broadcast %cst_17 : f32 to vector<8x64xf32>
    %24 = arith.maximumf %22, %23 : vector<8x64xf32>
    %c0_18 = arith.constant 0 : index
    %c0_19 = arith.constant 0 : index
    %25 = vector.load %arg8[%c0_18, %c0_19] : memref<1x64xf32, #tpu.memory_space<vmem>>, vector<1x64xf32>
    %26 = vector.broadcast %25 : vector<1x64xf32> to vector<8x64xf32>
    %27 = arith.mulf %24, %26 : vector<8x64xf32>
    %cst_20 = arith.constant dense<0.000000e+00> : vector<8xf32>
    %28 = vector.multi_reduction <add>, %27, %cst_20 [1] : vector<8x64xf32> to vector<8xf32>
    %29 = vector.shape_cast %28 : vector<8xf32> to vector<8x1xf32>
    %c0_21 = arith.constant 0 : index
    %c0_22 = arith.constant 0 : index
    %30 = vector.load %arg9[%c0_21, %c0_22] : memref<1x1xf32, #tpu.memory_space<vmem>>, vector<1x1xf32>
    %31 = vector.broadcast %30 : vector<1x1xf32> to vector<8x1xf32>
    %32 = arith.addf %29, %31 : vector<8x1xf32>
    %33 = math.absf %32 : vector<8x1xf32>
    %cst_23 = arith.constant 0.000000e+00 : f32
    %34 = vector.broadcast %cst_23 : f32 to vector<8x1xf32>
    %35 = arith.subf %34, %33 : vector<8x1xf32>
    %36 = math.exp %35 : vector<8x1xf32>
    %cst_24 = arith.constant 1.000000e+00 : f32
    %37 = vector.broadcast %cst_24 : f32 to vector<8x1xf32>
    %38 = arith.addf %37, %36 : vector<8x1xf32>
    %39 = tpu.reciprocal %38 {approx = true} : vector<8x1xf32> -> vector<8x1xf32>
    %cst_25 = arith.constant 0.000000e+00 : f32
    %40 = vector.broadcast %cst_25 : f32 to vector<8x1xf32>
    %41 = arith.cmpf oge, %32, %40 : vector<8x1xf32>
    %cst_26 = arith.constant 1.000000e+00 : f32
    %42 = vector.broadcast %cst_26 : f32 to vector<8x1xf32>
    %43 = arith.subf %42, %39 : vector<8x1xf32>
    %44 = arith.select %41, %39, %43 : vector<8x1xi1>, vector<8x1xf32>
    %cst_27 = arith.constant 0.000000e+00 : f32
    %cst_28 = arith.constant 1.000000e+00 : f32
    %45 = vector.broadcast %cst_27 : f32 to vector<8x1xf32>
    %46 = arith.maximumf %45, %44 : vector<8x1xf32>
    %47 = vector.broadcast %cst_28 : f32 to vector<8x1xf32>
    %48 = arith.minimumf %47, %46 : vector<8x1xf32>
    %c0_29 = arith.constant 0 : index
    %c0_30 = arith.constant 0 : index
    %49 = vector.load %arg10[%c0_29, %c0_30] : memref<8x1xf32, #tpu.memory_space<vmem>>, vector<8x1xf32>
    tpu.vector_store %arg10[%c0_29, %c0_30], %48 {strides = array<i32>} : memref<8x1xf32, #tpu.memory_space<vmem>>, vector<8x1xf32>,
    return
  }
  func.func @transform_0(%arg0: i32) -> (i32, i32) {
    %c0_i32 = arith.constant 0 : i32
    %c0_i32_0 = arith.constant 0 : i32
    return %arg0, %c0_i32 : i32, i32
  }
  func.func @transform_1(%arg0: i32) -> (i32, i32) {
    %c0_i32 = arith.constant 0 : i32
    %c0_i32_0 = arith.constant 0 : i32
    %c0_i32_1 = arith.constant 0 : i32
    return %c0_i32, %c0_i32_0 : i32, i32
  }
  func.func @transform_2(%arg0: i32) -> (i32, i32) {
    %c0_i32 = arith.constant 0 : i32
    %c0_i32_0 = arith.constant 0 : i32
    %c0_i32_1 = arith.constant 0 : i32
    return %c0_i32, %c0_i32_0 : i32, i32
  }
  func.func @transform_3(%arg0: i32) -> (i32, i32) {
    %c0_i32 = arith.constant 0 : i32
    %c0_i32_0 = arith.constant 0 : i32
    %c0_i32_1 = arith.constant 0 : i32
    return %c0_i32, %c0_i32_0 : i32, i32
  }
  func.func @transform_4(%arg0: i32) -> (i32, i32) {
    %c0_i32 = arith.constant 0 : i32
    %c0_i32_0 = arith.constant 0 : i32
    %c0_i32_1 = arith.constant 0 : i32
    return %c0_i32, %c0_i32_0 : i32, i32
  }
  func.func @transform_5(%arg0: i32) -> (i32, i32) {
    %c0_i32 = arith.constant 0 : i32
    %c0_i32_0 = arith.constant 0 : i32
    %c0_i32_1 = arith.constant 0 : i32
    return %c0_i32, %c0_i32_0 : i32, i32
  }
  func.func @transform_6(%arg0: i32) -> (i32, i32) {
    %c0_i32 = arith.constant 0 : i32
    %c0_i32_0 = arith.constant 0 : i32
    %c0_i32_1 = arith.constant 0 : i32
    return %c0_i32, %c0_i32_0 : i32, i32
  }
  func.func @transform_7(%arg0: i32) -> (i32, i32) {
    %c0_i32 = arith.constant 0 : i32
    %c0_i32_0 = arith.constant 0 : i32
    %c0_i32_1 = arith.constant 0 : i32
    return %c0_i32, %c0_i32_0 : i32, i32
  }
  func.func @transform_8(%arg0: i32) -> (i32, i32) {
    %c0_i32 = arith.constant 0 : i32
    %c0_i32_0 = arith.constant 0 : i32
    %c0_i32_1 = arith.constant 0 : i32
    return %c0_i32, %c0_i32_0 : i32, i32
  }
  func.func @transform_9(%arg0: i32) -> (i32, i32) {
    %c0_i32 = arith.constant 0 : i32
    %c0_i32_0 = arith.constant 0 : i32
    return %arg0, %c0_i32 : i32, i32
  }
}

</mosaic_0001>

<llo_original>
// kernel: advanced_nn_forward.1
$region0: #{advanced_nn_forward.1}
  #allocation0 [shape = 'u32[]', space=smem, size = 0x4, offset = 0x4, fixed_abs, tag = 'smem constant byte address 0x4 - core index']
  #allocation1 [shape = 'u32[144,128]{1,0:T(1,128)}', space=vmem, size = 0x12000, scoped, tag = 'internal scratch']
  #allocation2 [shape = 'f32[1,1]{1,0:T(1,128)S(1)}', space=vmem, size = 0x200, scoped, tag = 'scoped memory for advanced_nn_forward.1']
  %s0 = inlined_call_operand.vmem [shape: f32[8,32], index: 0, kind: input, shape index: {}]
  %s1 = inlined_call_operand.vmem [shape: bf16[32,256], index: 1, kind: input, shape index: {}]
  %s2 = inlined_call_operand.vmem [shape: f32[1,256], index: 2, kind: input, shape index: {}]
  %s3 = inlined_call_operand.hbm [shape: bf16[256,128], index: 3, kind: input, shape index: {}]
  %s4 = inlined_call_operand.vmem [shape: f32[1,128], index: 4, kind: input, shape index: {}]
  %s5 = inlined_call_operand.vmem [shape: bf16[128,64], index: 5, kind: input, shape index: {}]
  %s6 = inlined_call_operand.vmem [shape: f32[1,64], index: 6, kind: input, shape index: {}]
  %s7 = inlined_call_operand.vmem [shape: f32[1,64], index: 7, kind: input, shape index: {}]
  %s8 = inlined_call_operand.<no memory space> [shape: f32[1,1], index: 8, kind: input, shape index: {}]
  %s9 = inlined_call_operand.vmem [shape: f32[8,1], index: 9, kind: output, shape index: {}]
  %s10 = sld [smem:[#allocation0]]
  $region50: #{advanced_nn_forward.1} parent=0
    _
  %s12 = ssub.s32 1, %s10
  %s13 = scalar_select 0, %s12, %s10
  %v14 = vstv %s8
  %15 = vst [vmem:[#allocation2] sm:$0x1] %v14
  $region1: #{advanced_nn_forward.1} parent=0
    #allocation3 [shape = 'u8[65536]{0}', space=vmem, size = 0x10000, scoped, tag = 'input window, operand 3, single buffered']
    #allocation4 [shape = 's32[1]{0}', space=sflag, size = 0x4, scoped, tag = 'scoped memory for advanced_nn_forward.1']
    %16 = vsyncpa [#allocation4], 0
    // Predicated region
    $region2: #{advanced_nn_forward.1} parent=1 // pred_check
      _
    $region3: #{advanced_nn_forward.1} parent=1 // pred_check_branch
      %18 = sbr.rel (0) target = $region5
    $region4: #{advanced_nn_forward.1} parent=1 // pred_region
      _
    $region5: #{advanced_nn_forward.1} parent=1 // pred_fallthru
      _
    // Predicated region
    $region6: #{advanced_nn_forward.1} parent=1 // pred_check
      _
    $region7: #{advanced_nn_forward.1} parent=1 // pred_check_branch
      %20 = sbr.rel (0) target = $region9
    $region8: #{advanced_nn_forward.1} parent=1 // pred_region
      _
    $region9: #{advanced_nn_forward.1} parent=1 // pred_fallthru
      _
    // Predicated region
    $region10: #{advanced_nn_forward.1} parent=1 // pred_check
      _
    $region11: #{advanced_nn_forward.1} parent=1 // pred_check_branch
      %22 = sbr.rel (0) target = $region13
    $region12: #{advanced_nn_forward.1} parent=1 // pred_region
      _
    $region13: #{advanced_nn_forward.1} parent=1 // pred_fallthru
      _
    // Predicated region
    $region14: #{advanced_nn_forward.1} parent=1 // pred_check
      _
    $region15: #{advanced_nn_forward.1} parent=1 // pred_check_branch
      %24 = sbr.rel (0) target = $region17
    $region16: #{advanced_nn_forward.1} parent=1 // pred_region
      %s26 = ssub.s32 2048, 2048
      %27 = vsyncadd [#allocation4], %s26
      %s28 = sshll.u32 [#allocation3], 4
      %s29 = int_to_ptr.vmem [resolvable:$true] %s28
      %34 = dma.hbm_to_vmem [thread:$0]  %s3, 2048, %s29, [#allocation4], 64, 64, 4
    $region17: #{advanced_nn_forward.1} parent=1 // pred_fallthru
      _
    // Predicated region
    $region18: #{advanced_nn_forward.1} parent=1 // pred_check
      _
    $region19: #{advanced_nn_forward.1} parent=1 // pred_check_branch
      %36 = sbr.rel (0) target = $region21
    $region20: #{advanced_nn_forward.1} parent=1 // pred_region
      _
    $region21: #{advanced_nn_forward.1} parent=1 // pred_fallthru
      _
    // Predicated region
    $region22: #{advanced_nn_forward.1} parent=1 // pred_check
      _
    $region23: #{advanced_nn_forward.1} parent=1 // pred_check_branch
      %38 = sbr.rel (0) target = $region25
    $region24: #{advanced_nn_forward.1} parent=1 // pred_region
      _
    $region25: #{advanced_nn_forward.1} parent=1 // pred_fallthru
      _
    // Predicated region
    $region26: #{advanced_nn_forward.1} parent=1 // pred_check
      _
    $region27: #{advanced_nn_forward.1} parent=1 // pred_check_branch
      %40 = sbr.rel (0) target = $region29
    $region28: #{advanced_nn_forward.1} parent=1 // pred_region
      _
    $region29: #{advanced_nn_forward.1} parent=1 // pred_fallthru
      _
    // Predicated region
    $region30: #{advanced_nn_forward.1} parent=1 // pred_check
      _
    $region31: #{advanced_nn_forward.1} parent=1 // pred_check_branch
      %42 = sbr.rel (0) target = $region33
    $region32: #{advanced_nn_forward.1} parent=1 // pred_region
      _
    $region33: #{advanced_nn_forward.1} parent=1 // pred_fallthru
      _
    // Predicated region
    $region34: #{advanced_nn_forward.1} parent=1 // pred_check
      _
    $region35: #{advanced_nn_forward.1} parent=1 // pred_check_branch
      %44 = sbr.rel (0) target = $region37
    $region36: #{advanced_nn_forward.1} parent=1 // pred_region
      _
    $region37: #{advanced_nn_forward.1} parent=1 // pred_fallthru
      _
    // Predicated region
    $region38: #{advanced_nn_forward.1} parent=1 // pred_check
      _
    $region39: #{advanced_nn_forward.1} parent=1 // pred_check_branch
      %46 = sbr.rel (0) target = $region41
    $region40: #{advanced_nn_forward.1} parent=1 // pred_region
      %47 = dma.done [#allocation4], 2048
    $region41: #{advanced_nn_forward.1} parent=1 // pred_fallthru
      _
    %v49 = vld [vmem:[%s0] sm:$0xff]
    %v50 = vpack.c.bf16 %v49, %v49
    %v51 = vld [vmem:[%s1] sm:$0xff]
    %v52 = vld [vmem:[%s1 + $0x8] sm:$0xff]
    %v53 = vld [vmem:[%s1 + $0x10] sm:$0xff]
    %v54 = vld [vmem:[%s1 + $0x18] sm:$0xff]
    %v55 = vld [vmem:[%s2] sm:$0x3]
    %v57 = vlaneseq
    %v58 = vshrl.u32 %v57, 7
    %v59 = vsub.s32 0, %v58
    %v60 = vrot.slane %v55, %v59
    %v61 = vlaneseq
    %v62 = vshrl.u32 %v61, 7
    %v63 = vsub.s32 1, %v62
    %v64 = vrot.slane %v55, %v63
    %v71 = vunpack.c.l.b16 %v51
    %v72 = vunpack.c.h.b16 %v51
    %v73 = vunpack.c.l.b16 %v52
    %v74 = vunpack.c.h.b16 %v52
    %v75 = vunpack.c.l.b16 %v53
    %v76 = vunpack.c.h.b16 %v53
    %v77 = vunpack.c.l.b16 %v54
    %v78 = vunpack.c.h.b16 %v54
    %v79 = vpack.c.b16 %v73, %v71
    %v80 = vpack.c.b16 %v74, %v72
    %v81 = vpack.c.b16 %v77, %v75
    %v82 = vpack.c.b16 %v78, %v76
    %vm87 = vcmask 261120
    %v89 = vsel %vm87, %v50, 0
    %91 = vmatprep.subr.bf16.mxu0 %v80
    %92 = vmatpush1.bf16.msra.mxu0 %v79
    %93 = vmatprep.subr.bf16.mxu0 %v82
    %94 = vmatpush1.bf16.msra.mxu0 %v81
    %95 = vmatprep.subr.bf16.mxu0 0
    %96 = vmatpush1.bf16.msra.mxu0 0
    %97 = vmatprep.subr.bf16.mxu0 0
    %98 = vmatpush1.bf16.msra.mxu0 0
    %99 = vmatprep.subr.bf16.mxu0 0
    %100 = vmatpush1.bf16.msra.mxu0 0
    %101 = vmatprep.subr.bf16.mxu0 0
    %102 = vmatpush1.bf16.msra.mxu0 0
    %103 = vmatprep.subr.bf16.mxu0 0
    %104 = vmatpush1.bf16.msra.mxu0 0
    %105 = vmatprep.subr.bf16.mxu0 0
    %106 = vmatpush1.bf16.msra.mxu0 0
    %107 = vmatprep.subr.bf16.mxu0 0
    %108 = vmatpush1.bf16.msra.mxu0 0
    %109 = vmatprep.subr.bf16.mxu0 0
    %110 = vmatpush1.bf16.msra.mxu0 0
    %111 = vmatprep.subr.bf16.mxu0 0
    %112 = vmatpush1.bf16.msra.mxu0 0
    %113 = vmatprep.subr.bf16.mxu0 0
    %114 = vmatpush1.bf16.msra.mxu0 0
    %115 = vmatprep.subr.bf16.mxu0 0
    %116 = vmatpush1.bf16.msra.mxu0 0
    %117 = vmatprep.subr.bf16.mxu0 0
    %118 = vmatpush1.bf16.msra.mxu0 0
    %119 = vmatprep.subr.bf16.mxu0 0
    %120 = vmatpush1.bf16.msra.mxu0 0
    %121 = vmatprep.subr.bf16.mxu0 0
    %122 = vmatpush1.bf16.msra.mxu0 0
    %123 = vmatprep.mubr.bf16.mxu0 0
    %124 = vmatmul.mubr.bf16.gmra.mrb[0].mxu0 %v89
    %v125 = vpop.f32.mrb[0].mxu0
    %v126 = vadd.f32 %v60, %v125
    %v127 = vpop.f32.mrb[0].mxu0
    %v128 = vadd.f32 %v64, %v127
    %v129 = vpop.f32.mrb[0].mxu0
    %v130 = vpop.f32.mrb[0].mxu0
    %131 = vdwg.mxu0
    %v132 = vmax.f32 %v126, 0.0
    %v133 = vmax.f32 %v128, 0.0
    %v134 = vpack.c.bf16 %v132, %v132
    %v135 = vpack.c.bf16 %v133, %v133
    %v136 = vld [vmem:[#allocation3] sm:$0xf]
    %v137 = vld [vmem:[#allocation3 + $0x4] sm:$0xf]
    %v138 = vld [vmem:[#allocation3 + $0x8] sm:$0xf]
    %v139 = vld [vmem:[#allocation3 + $0xc] sm:$0xf]
    %v140 = vld [vmem:[#allocation3 + $0x10] sm:$0xf]
    %v141 = vld [vmem:[#allocation3 + $0x14] sm:$0xf]
    %v142 = vld [vmem:[#allocation3 + $0x18] sm:$0xf]
    %v143 = vld [vmem:[#allocation3 + $0x1c] sm:$0xf]
    %v144 = vld [vmem:[#allocation3 + $0x20] sm:$0xf]
    %v145 = vld [vmem:[#allocation3 + $0x24] sm:$0xf]
    %v146 = vld [vmem:[#allocation3 + $0x28] sm:$0xf]
    %v147 = vld [vmem:[#allocation3 + $0x2c] sm:$0xf]
    %v148 = vld [vmem:[#allocation3 + $0x30] sm:$0xf]
    %v149 = vld [vmem:[#allocation3 + $0x34] sm:$0xf]
    %v150 = vld [vmem:[#allocation3 + $0x38] sm:$0xf]
    %v151 = vld [vmem:[#allocation3 + $0x3c] sm:$0xf]
    %v152 = vld [vmem:[#allocation3 + $0x40] sm:$0xf]
    %v153 = vld [vmem:[#allocation3 + $0x44] sm:$0xf]
    %v154 = vld [vmem:[#allocation3 + $0x48] sm:$0xf]
    %v155 = vld [vmem:[#allocation3 + $0x4c] sm:$0xf]
    %v156 = vld [vmem:[#allocation3 + $0x50] sm:$0xf]
    %v157 = vld [vmem:[#allocation3 + $0x54] sm:$0xf]
    %v158 = vld [vmem:[#allocation3 + $0x58] sm:$0xf]
    %v159 = vld [vmem:[#allocation3 + $0x5c] sm:$0xf]
    %v160 = vld [vmem:[#allocation3 + $0x60] sm:$0xf]
    %v161 = vld [vmem:[#allocation3 + $0x64] sm:$0xf]
    %v162 = vld [vmem:[#allocation3 + $0x68] sm:$0xf]
    %v163 = vld [vmem:[#allocation3 + $0x6c] sm:$0xf]
    %v164 = vld [vmem:[#allocation3 + $0x70] sm:$0xf]
    %v165 = vld [vmem:[#allocation3 + $0x74] sm:$0xf]
    %v166 = vld [vmem:[#allocation3 + $0x78] sm:$0xf]
    %v167 = vld [vmem:[#allocation3 + $0x7c] sm:$0xf]
    %v168 = vld [vmem:[%s4] sm:$0x1]
    %v170 = vlaneseq
    %v171 = vshrl.u32 %v170, 7
    %v172 = vsub.s32 0, %v171
    %v173 = vrot.slane %v168, %v172
    %v207 = vunpack.c.l.b16 %v136
    %v208 = vunpack.c.l.b16 %v137
    %v209 = vunpack.c.l.b16 %v138
    %v210 = vunpack.c.l.b16 %v139
    %v211 = vunpack.c.l.b16 %v140
    %v212 = vunpack.c.l.b16 %v141
    %v213 = vunpack.c.l.b16 %v142
    %v214 = vunpack.c.l.b16 %v143
    %v215 = vunpack.c.l.b16 %v144
    %v216 = vunpack.c.l.b16 %v145
    %v217 = vunpack.c.l.b16 %v146
    %v218 = vunpack.c.l.b16 %v147
    %v219 = vunpack.c.l.b16 %v148
    %v220 = vunpack.c.l.b16 %v149
    %v221 = vunpack.c.l.b16 %v150
    %v222 = vunpack.c.l.b16 %v151
    %v223 = vunpack.c.l.b16 %v152
    %v224 = vunpack.c.l.b16 %v153
    %v225 = vunpack.c.l.b16 %v154
    %v226 = vunpack.c.l.b16 %v155
    %v227 = vunpack.c.l.b16 %v156
    %v228 = vunpack.c.l.b16 %v157
    %v229 = vunpack.c.l.b16 %v158
    %v230 = vunpack.c.l.b16 %v159
    %v231 = vunpack.c.l.b16 %v160
    %v232 = vunpack.c.l.b16 %v161
    %v233 = vunpack.c.l.b16 %v162
    %v234 = vunpack.c.l.b16 %v163
    %v235 = vunpack.c.l.b16 %v164
    %v236 = vunpack.c.l.b16 %v165
    %v237 = vunpack.c.l.b16 %v166
    %v238 = vunpack.c.l.b16 %v167
    %v239 = vpack.c.b16 %v208, %v207
    %v240 = vpack.c.b16 %v210, %v209
    %v241 = vpack.c.b16 %v212, %v211
    %v242 = vpack.c.b16 %v214, %v213
    %v243 = vpack.c.b16 %v216, %v215
    %v244 = vpack.c.b16 %v218, %v217
    %v245 = vpack.c.b16 %v220, %v219
    %v246 = vpack.c.b16 %v222, %v221
    %v247 = vpack.c.b16 %v224, %v223
    %v248 = vpack.c.b16 %v226, %v225
    %v249 = vpack.c.b16 %v228, %v227
    %v250 = vpack.c.b16 %v230, %v229
    %v251 = vpack.c.b16 %v232, %v231
    %v252 = vpack.c.b16 %v234, %v233
    %v253 = vpack.c.b16 %v236, %v235
    %v254 = vpack.c.b16 %v238, %v237
    %271 = vmatprep.subr.bf16.mxu0 0
    %272 = vmatpush1.bf16.msra.mxu0 %v239
    %273 = vmatprep.subr.bf16.mxu0 0
    %274 = vmatpush1.bf16.msra.mxu0 %v240
    %275 = vmatprep.subr.bf16.mxu0 0
    %276 = vmatpush1.bf16.msra.mxu0 %v241
    %277 = vmatprep.subr.bf16.mxu0 0
    %278 = vmatpush1.bf16.msra.mxu0 %v242
    %279 = vmatprep.subr.bf16.mxu0 0
    %280 = vmatpush1.bf16.msra.mxu0 %v243
    %281 = vmatprep.subr.bf16.mxu0 0
    %282 = vmatpush1.bf16.msra.mxu0 %v244
    %283 = vmatprep.subr.bf16.mxu0 0
    %284 = vmatpush1.bf16.msra.mxu0 %v245
    %285 = vmatprep.subr.bf16.mxu0 0
    %286 = vmatpush1.bf16.msra.mxu0 %v246
    %287 = vmatprep.subr.bf16.mxu0 0
    %288 = vmatpush1.bf16.msra.mxu0 %v247
    %289 = vmatprep.subr.bf16.mxu0 0
    %290 = vmatpush1.bf16.msra.mxu0 %v248
    %291 = vmatprep.subr.bf16.mxu0 0
    %292 = vmatpush1.bf16.msra.mxu0 %v249
    %293 = vmatprep.subr.bf16.mxu0 0
    %294 = vmatpush1.bf16.msra.mxu0 %v250
    %295 = vmatprep.subr.bf16.mxu0 0
    %296 = vmatpush1.bf16.msra.mxu0 %v251
    %297 = vmatprep.subr.bf16.mxu0 0
    %298 = vmatpush1.bf16.msra.mxu0 %v252
    %299 = vmatprep.subr.bf16.mxu0 0
    %300 = vmatpush1.bf16.msra.mxu0 %v253
    %301 = vmatprep.subr.bf16.mxu0 0
    %302 = vmatpush1.bf16.msra.mxu0 %v254
    %303 = vmatprep.mubr.bf16.mxu0 %v135
    %304 = vmatmul.mubr.bf16.gmra.mrb[0].mxu0 %v134
    %v305 = vpop.f32.mrb[0].mxu0
    %v306 = vadd.f32 %v173, %v305
    %v307 = vpop.f32.mrb[0].mxu0
    %v308 = vpop.f32.mrb[0].mxu0
    %v309 = vpop.f32.mrb[0].mxu0
    %310 = vdwg.mxu0
    %v311 = vmax.f32 %v306, 0.0
    %v312 = vpack.c.bf16 %v311, %v311
    %v313 = vld [vmem:[%s5] sm:$0xf]
    %v314 = vld [vmem:[%s5 + $0x4] sm:$0xf]
    %v315 = vld [vmem:[%s5 + $0x8] sm:$0xf]
    %v316 = vld [vmem:[%s5 + $0xc] sm:$0xf]
    %v317 = vld [vmem:[%s5 + $0x10] sm:$0xf]
    %v318 = vld [vmem:[%s5 + $0x14] sm:$0xf]
    %v319 = vld [vmem:[%s5 + $0x18] sm:$0xf]
    %v320 = vld [vmem:[%s5 + $0x1c] sm:$0xf]
    %v321 = vld [vmem:[%s5 + $0x20] sm:$0xf]
    %v322 = vld [vmem:[%s5 + $0x24] sm:$0xf]
    %v323 = vld [vmem:[%s5 + $0x28] sm:$0xf]
    %v324 = vld [vmem:[%s5 + $0x2c] sm:$0xf]
    %v325 = vld [vmem:[%s5 + $0x30] sm:$0xf]
    %v326 = vld [vmem:[%s5 + $0x34] sm:$0xf]
    %v327 = vld [vmem:[%s5 + $0x38] sm:$0xf]
    %v328 = vld [vmem:[%s5 + $0x3c] sm:$0xf]
    %v329 = vld [vmem:[%s6] sm:$0x1]
    %v331 = vlaneseq
    %v332 = vshrl.u32 %v331, 7
    %v333 = vsub.s32 0, %v332
    %v334 = vrot.slane %v329, %v333
    %v352 = vunpack.c.l.b16 %v313
    %v353 = vunpack.c.l.b16 %v314
    %v354 = vunpack.c.l.b16 %v315
    %v355 = vunpack.c.l.b16 %v316
    %v356 = vunpack.c.l.b16 %v317
    %v357 = vunpack.c.l.b16 %v318
    %v358 = vunpack.c.l.b16 %v319
    %v359 = vunpack.c.l.b16 %v320
    %v360 = vunpack.c.l.b16 %v321
    %v361 = vunpack.c.l.b16 %v322
    %v362 = vunpack.c.l.b16 %v323
    %v363 = vunpack.c.l.b16 %v324
    %v364 = vunpack.c.l.b16 %v325
    %v365 = vunpack.c.l.b16 %v326
    %v366 = vunpack.c.l.b16 %v327
    %v367 = vunpack.c.l.b16 %v328
    %v368 = vpack.c.b16 %v353, %v352
    %v369 = vpack.c.b16 %v355, %v354
    %v370 = vpack.c.b16 %v357, %v356
    %v371 = vpack.c.b16 %v359, %v358
    %v372 = vpack.c.b16 %v361, %v360
    %v373 = vpack.c.b16 %v363, %v362
    %v374 = vpack.c.b16 %v365, %v364
    %v375 = vpack.c.b16 %v367, %v366
    %384 = vmatprep.subr.bf16.mxu0 0
    %385 = vmatpush1.bf16.msra.mxu0 %v368
    %386 = vmatprep.subr.bf16.mxu0 0
    %387 = vmatpush1.bf16.msra.mxu0 %v369
    %388 = vmatprep.subr.bf16.mxu0 0
    %389 = vmatpush1.bf16.msra.mxu0 %v370
    %390 = vmatprep.subr.bf16.mxu0 0
    %391 = vmatpush1.bf16.msra.mxu0 %v371
    %392 = vmatprep.subr.bf16.mxu0 0
    %393 = vmatpush1.bf16.msra.mxu0 %v372
    %394 = vmatprep.subr.bf16.mxu0 0
    %395 = vmatpush1.bf16.msra.mxu0 %v373
    %396 = vmatprep.subr.bf16.mxu0 0
    %397 = vmatpush1.bf16.msra.mxu0 %v374
    %398 = vmatprep.subr.bf16.mxu0 0
    %399 = vmatpush1.bf16.msra.mxu0 %v375
    %400 = vmatprep.subr.bf16.mxu0 0
    %401 = vmatpush1.bf16.msra.mxu0 0
    %402 = vmatprep.subr.bf16.mxu0 0
    %403 = vmatpush1.bf16.msra.mxu0 0
    %404 = vmatprep.subr.bf16.mxu0 0
    %405 = vmatpush1.bf16.msra.mxu0 0
    %406 = vmatprep.subr.bf16.mxu0 0
    %407 = vmatpush1.bf16.msra.mxu0 0
    %408 = vmatprep.subr.bf16.mxu0 0
    %409 = vmatpush1.bf16.msra.mxu0 0
    %410 = vmatprep.subr.bf16.mxu0 0
    %411 = vmatpush1.bf16.msra.mxu0 0
    %412 = vmatprep.subr.bf16.mxu0 0
    %413 = vmatpush1.bf16.msra.mxu0 0
    %414 = vmatprep.subr.bf16.mxu0 0
    %415 = vmatpush1.bf16.msra.mxu0 0
    %416 = vmatprep.mubr.bf16.mxu0 0
    %417 = vmatmul.mubr.bf16.gmra.mrb[0].mxu0 %v312
    %v418 = vpop.f32.mrb[0].mxu0
    %v419 = vadd.f32 %v334, %v418
    %v420 = vpop.f32.mrb[0].mxu0
    %v421 = vpop.f32.mrb[0].mxu0
    %v422 = vpop.f32.mrb[0].mxu0
    %423 = vdwg.mxu0
    %v424 = vmax.f32 %v419, 0.0
    %v425 = vld [vmem:[%s7] sm:$0x1]
    %v427 = vlaneseq
    %v428 = vshrl.u32 %v427, 7
    %v429 = vsub.s32 0, %v428
    %v430 = vrot.slane %v425, %v429
    %v432 = vmul.f32 %v424, %v430
    %vm433 = vcmask 523264
    %v434 = vsel %vm433, %v432, 0.0
    %435 = vadd.xlane.f32.xlu0 %v434
    %v436 = vpop.xlane.xlu0 %435
    %v437 = vld [vmem:[#allocation2] sm:$0x1]
    %v439 = vlaneseq
    %v440 = vshrl.u32 %v439, 7
    %v441 = vsub.s32 0, %v440
    %v442 = vrot.slane %v437, %v441
    %v444 = vadd.f32 %v436, %v442
    %v445 = vand.u32 2147483647, %v444
    %v446 = vsub.f32 0.0, %v445
    %v447 = vmul.f32 %v446, 1.442695
    %v448 = vpow.pop %v447
    %v449 = vadd.f32 %v448, 1.0
    %v450 = vrcp.pop %v449
    %vm451 = vcmp.ge.f32.partialorder %v444, 0.0
    %v452 = vsub.f32 1.0, %v450
    %v453 = vsel %vm451, %v450, %v452
    %v454 = vmax.f32 %v453, 0.0
    %v455 = vmin.f32 %v454, 1.0
    %vm456 = vcmask 7168
    %457 = vst.msk [vmem:[%s9] sm:$0xff] %vm456, %v455
    // Predicated region
    $region42: #{advanced_nn_forward.1} parent=1 // pred_check
      _
    $region43: #{advanced_nn_forward.1} parent=1 // pred_check_branch
      %459 = sbr.rel (0) target = $region45
    $region44: #{advanced_nn_forward.1} parent=1 // pred_region
      _
    $region45: #{advanced_nn_forward.1} parent=1 // pred_fallthru
      _
    // Predicated region
    $region46: #{advanced_nn_forward.1} parent=1 // pred_check
      _
    $region47: #{advanced_nn_forward.1} parent=1 // pred_check_branch
      %461 = sbr.rel (0) target = $region49
    $region48: #{advanced_nn_forward.1} parent=1 // pred_region
      _
    $region49: #{advanced_nn_forward.1} parent=1 // pred_fallthru
      _
    %462 = vsyncpa [#allocation4], 1

</llo_original>
